<compile_context>
chip_gen: v6e
topology: v6e:2x2x1
jax: 0.10.0
libtpu: 0.0.40
codegen_flags: <defaults>
</compile_context>

<pallas_src>
import functools

import jax
import jax.numpy as jnp
import numpy as np
from jax.experimental import pallas as pl
from jax.experimental.pallas import tpu as pltpu

# Segment boundaries: [15, 48, 23, 20] are softmaxed; [2, 3] pass through.
_SEG_STARTS = (0, 15, 63, 86)
_SEG_ENDS = (15, 63, 86, 106)
_PASSTHRU_START = 106
_NUM_CLASSES = 111            # 15 + 48 + 23 + 20 + 2 + 3
_EPS = 1e-20                  # matches the PyTorch sample_gumbel eps
_NEG_BIG = -1e30              # exp(-1e30) underflows cleanly to 0 in f32
_DENOM_EPS = 1e-30            # NaN guard; <= 1e-17 relative perturbation here


def _round_up(x, m):
    return (x + m - 1) // m * m


def _make_segment_indicator():
    """(111, 111) block-diagonal 0/1 matrix: S[j, k] = 1 iff j, k in same
    softmax segment.  e @ S gives the per-segment sums, already broadcast to
    every lane of the segment; passthrough rows/cols are all zero."""
    s = np.zeros((_NUM_CLASSES, _NUM_CLASSES), np.float32)
    for a, b in zip(_SEG_STARTS, _SEG_ENDS):
        s[a:b, a:b] = 1.0
    return s


_SEG_INDICATOR = _make_segment_indicator()


def _make_kernel(temperature: float):
    inv_t = 1.0 / float(temperature)

    def kernel(x_ref, u_ref, s_ref, o_ref):
        x = x_ref[...]                                  # (TB, 111) f32
        u = u_ref[...]                                  # (TB, 111) f32

        # Gumbel(0,1) noise + temperature scaling, one full-width pass.
        g = -jnp.log(-jnp.log(u + _EPS) + _EPS)
        y = (x + g) * inv_t

        lane = jax.lax.broadcasted_iota(jnp.int32, (1, _NUM_CLASSES), 1)
        softmax_mask = lane < _PASSTHRU_START           # (1, 111) bool

        # Single masked row max shared by all 4 segments (softmax is shift
        # invariant, so the result is mathematically unchanged).
        m = jnp.max(jnp.where(softmax_mask, y, _NEG_BIG), axis=1, keepdims=True)

        # One exp over the whole slab; passthrough lanes forced to exp->0.
        e = jnp.exp(jnp.where(softmax_mask, y - m, _NEG_BIG))

        # Per-segment sums on the idle MXU; HIGHEST precision keeps f32
        # accuracy (single-pass bf16 would blow the 1e-5 tolerance).
        denom = jnp.dot(e, s_ref[...],
                        preferred_element_type=jnp.float32,
                        precision=jax.lax.Precision.HIGHEST)

        # _DENOM_EPS: passthrough lanes (denom == 0) divide safely, and a
        # fully-underflowed segment degrades to zeros instead of NaNs.
        p = e / (denom + _DENOM_EPS)

        # Assemble in registers; one store per row block (lanes 111..127 of
        # the last vreg are a masked vst — far cheaper than a pad pass).
        o_ref[...] = jnp.where(softmax_mask, p, x).astype(o_ref.dtype)

    return kernel


@functools.partial(jax.jit, static_argnames=("temperature", "block_rows"))
def attribute_logits_gumbel_sample(label_logits, uniform_noise, *,
                                   temperature, block_rows=1024):
    """label_logits: (B, 111); uniform_noise: (B, 111) in [0, 1) — only the
    first 106 noise columns are used (passthrough lanes ignore the noise).
    block_rows: 1024 is safe everywhere; 2048 is a good choice on v6e/v7x."""
    B, C = label_logits.shape
    assert C == _NUM_CLASSES, f"expected {_NUM_CLASSES} classes, got {C}"
    assert uniform_noise.shape == (B, _NUM_CLASSES), uniform_noise.shape

    x = label_logits.astype(jnp.float32)
    u = uniform_noise.astype(jnp.float32)
    s = jnp.asarray(_SEG_INDICATOR)                     # (111, 111) f32, ~49 KB

    # Row-block size: multiple of 8, capped by block_rows; when B is large
    # enough, force >= 2 grid steps so v7x megacore gets both TensorCores.
    tb = min(int(block_rows), _round_up(B, 8))
    if B >= 16 and pl.cdiv(B, tb) < 2:
        tb = _round_up(pl.cdiv(B, 2), 8)
    grid = (pl.cdiv(B, tb),)

    out = pl.pallas_call(
        _make_kernel(temperature),
        out_shape=jax.ShapeDtypeStruct((B, _NUM_CLASSES), jnp.float32),
        grid_spec=pl.GridSpec(
            grid=grid,
            in_specs=[
                pl.BlockSpec((tb, _NUM_CLASSES), lambda i: (i, 0)),
                pl.BlockSpec((tb, _NUM_CLASSES), lambda i: (i, 0)),
                # Segment indicator: same block every step -> stays resident.
                pl.BlockSpec((_NUM_CLASSES, _NUM_CLASSES), lambda i: (0, 0)),
            ],
            out_specs=pl.BlockSpec((tb, _NUM_CLASSES), lambda i: (i, 0)),
        ),
        compiler_params=pltpu.CompilerParams(
            dimension_semantics=("parallel",),
        ),
    )(x, u, s)

    return out.astype(label_logits.dtype)


def _reference(label_logits, uniform_noise, temperature):
    """Pure-JAX reference mirroring the PyTorch forward."""
    g = -jnp.log(-jnp.log(uniform_noise + _EPS) + _EPS)
    outs = []
    for a, b in zip(_SEG_STARTS, _SEG_ENDS):
        y = (label_logits[:, a:b] + g[:, a:b]) / temperature
        outs.append(jax.nn.softmax(y, axis=1))
    outs.append(label_logits[:, _PASSTHRU_START:])
    return jnp.concatenate(outs, axis=1)


if __name__ == "__main__":
    temperature = 0.5  # module hyper-parameter (no learned weights)

    key = jax.random.PRNGKey(0)
    k_logits, k_noise = jax.random.split(key)

    # B=10 exercises the ragged (non-multiple-of-8) boundary row block and the
    # 111-of-128 masked lane store.
    B = 10
    label_logits = jax.random.normal(k_logits, (B, _NUM_CLASSES), dtype=jnp.float32)
    # Explicit uniform noise replaces the module-internal torch.rand so the
    # kernel is deterministic; last 5 columns are unused (passthrough lanes).
    uniform_noise = jax.random.uniform(
        k_noise, (B, _NUM_CLASSES), dtype=jnp.float32, minval=0.0, maxval=1.0
    )

    out = attribute_logits_gumbel_sample(
        label_logits, uniform_noise, temperature=temperature
    )
    out = jax.block_until_ready(out)

    ref = _reference(label_logits, uniform_noise, temperature)
    assert out.shape == (B, _NUM_CLASSES)
    assert jnp.allclose(out, ref, atol=1e-5, rtol=1e-5), "mismatch vs reference"

    print("KERNEL_OK")
</pallas_src>

<mosaic_0001>
module attributes {stable_mosaic.version = 11 : i64} {
  func.func @kernel(%arg0: i32, %arg1: memref<16x111xf32, #tpu.memory_space<vmem>>, %arg2: memref<16x111xf32, #tpu.memory_space<vmem>>, %arg3: memref<111x111xf32, #tpu.memory_space<vmem>>, %arg4: memref<16x111xf32, #tpu.memory_space<vmem>>) attributes {dimension_semantics = [#tpu.dimension_semantics<parallel>], iteration_bounds = array<i64: 1>, scalar_prefetch = 0 : i64, scratch_operands = 0 : i64, tpu.core_type = #tpu.core_type<tc>, window_params = [{transform_indices = @transform_0, window_bounds = array<i64: 16, 111>}, {transform_indices = @transform_1, window_bounds = array<i64: 16, 111>}, {pipeline_mode = #tpu.pipeline_mode<synchronous>, transform_indices = @transform_2, window_bounds = array<i64: 111, 111>}, {transform_indices = @transform_3, window_bounds = array<i64: 16, 111>}]} {
    %c0 = arith.constant 0 : index
    %c0_0 = arith.constant 0 : index
    %0 = vector.load %arg1[%c0, %c0_0] : memref<16x111xf32, #tpu.memory_space<vmem>>, vector<16x111xf32>
    %c0_1 = arith.constant 0 : index
    %c0_2 = arith.constant 0 : index
    %1 = vector.load %arg2[%c0_1, %c0_2] : memref<16x111xf32, #tpu.memory_space<vmem>>, vector<16x111xf32>
    %cst = arith.constant 9.99999968E-21 : f32
    %2 = vector.broadcast %cst : f32 to vector<16x111xf32>
    %3 = arith.addf %1, %2 : vector<16x111xf32>
    %4 = math.log %3 : vector<16x111xf32>
    %cst_3 = arith.constant 0.000000e+00 : f32
    %5 = vector.broadcast %cst_3 : f32 to vector<16x111xf32>
    %6 = arith.subf %5, %4 : vector<16x111xf32>
    %cst_4 = arith.constant 9.99999968E-21 : f32
    %7 = vector.broadcast %cst_4 : f32 to vector<16x111xf32>
    %8 = arith.addf %6, %7 : vector<16x111xf32>
    %9 = math.log %8 : vector<16x111xf32>
    %cst_5 = arith.constant 0.000000e+00 : f32
    %10 = vector.broadcast %cst_5 : f32 to vector<16x111xf32>
    %11 = arith.subf %10, %9 : vector<16x111xf32>
    %12 = arith.addf %0, %11 : vector<16x111xf32>
    %cst_6 = arith.constant 2.000000e+00 : f32
    %13 = vector.broadcast %cst_6 : f32 to vector<16x111xf32>
    %14 = arith.mulf %12, %13 : vector<16x111xf32>
    %15 = tpu.iota {dimensions = array<i32: 1>} : vector<1x111xi32>
    %c106_i32 = arith.constant 106 : i32
    %16 = vector.broadcast %c106_i32 : i32 to vector<1x111xi32>
    %17 = arith.cmpi slt, %15, %16 : vector<1x111xi32>
    %cst_7 = arith.constant -1.000000e+30 : f32
    %18 = vector.shape_cast %17 : vector<1x111xi1> to vector<1x111xi1>
    %19 = vector.broadcast %18 : vector<1x111xi1> to vector<16x111xi1>
    %20 = vector.broadcast %cst_7 : f32 to vector<16x111xf32>
    %21 = arith.select %19, %14, %20 : vector<16x111xi1>, vector<16x111xf32>
    %cst_8 = arith.constant dense<0xFF800000> : vector<16xf32>
    %22 = vector.multi_reduction <maximumf>, %21, %cst_8 [1] : vector<16x111xf32> to vector<16xf32>
    %23 = vector.shape_cast %22 : vector<16xf32> to vector<16x1xf32>
    %24 = vector.broadcast %23 : vector<16x1xf32> to vector<16x111xf32>
    %25 = arith.subf %14, %24 : vector<16x111xf32>
    %cst_9 = arith.constant -1.000000e+30 : f32
    %26 = vector.shape_cast %17 : vector<1x111xi1> to vector<1x111xi1>
    %27 = vector.broadcast %26 : vector<1x111xi1> to vector<16x111xi1>
    %28 = vector.broadcast %cst_9 : f32 to vector<16x111xf32>
    %29 = arith.select %27, %25, %28 : vector<16x111xi1>, vector<16x111xf32>
    %30 = math.exp %29 : vector<16x111xf32>
    %c0_10 = arith.constant 0 : index
    %c0_11 = arith.constant 0 : index
    %31 = vector.load %arg3[%c0_10, %c0_11] : memref<111x111xf32, #tpu.memory_space<vmem>>, vector<111x111xf32>
    %cst_12 = arith.constant dense<0.000000e+00> : vector<16x111xf32>
    %32 = tpu.matmul %30, %31, %cst_12 {dimension_numbers = #tpu.dot_dimension_numbers<[1], [0], [0], [1], [0, 0, 1, 1], [], []>, precision = #tpu.contract_precision<fp32>} : vector<16x111xf32>, vector<111x111xf32>, vector<16x111xf32> -> vector<16x111xf32>
    %cst_13 = arith.constant 1.000000e-30 : f32
    %33 = vector.broadcast %cst_13 : f32 to vector<16x111xf32>
    %34 = arith.addf %32, %33 : vector<16x111xf32>
    %35 = arith.divf %30, %34 : vector<16x111xf32>
    %36 = vector.shape_cast %17 : vector<1x111xi1> to vector<1x111xi1>
    %37 = vector.broadcast %36 : vector<1x111xi1> to vector<16x111xi1>
    %38 = arith.select %37, %35, %0 : vector<16x111xi1>, vector<16x111xf32>
    %c0_14 = arith.constant 0 : index
    %c0_15 = arith.constant 0 : index
    %39 = vector.load %arg4[%c0_14, %c0_15] : memref<16x111xf32, #tpu.memory_space<vmem>>, vector<16x111xf32>
    tpu.vector_store %arg4[%c0_14, %c0_15], %38 {strides = array<i32>} : memref<16x111xf32, #tpu.memory_space<vmem>>, vector<16x111xf32>,
    return
  }
  func.func @transform_0(%arg0: i32) -> (i32, i32) {
    %c0_i32 = arith.constant 0 : i32
    %c0_i32_0 = arith.constant 0 : i32
    return %arg0, %c0_i32 : i32, i32
  }
  func.func @transform_1(%arg0: i32) -> (i32, i32) {
    %c0_i32 = arith.constant 0 : i32
    %c0_i32_0 = arith.constant 0 : i32
    return %arg0, %c0_i32 : i32, i32
  }
  func.func @transform_2(%arg0: i32) -> (i32, i32) {
    %c0_i32 = arith.constant 0 : i32
    %c0_i32_0 = arith.constant 0 : i32
    %c0_i32_1 = arith.constant 0 : i32
    return %c0_i32, %c0_i32_0 : i32, i32
  }
  func.func @transform_3(%arg0: i32) -> (i32, i32) {
    %c0_i32 = arith.constant 0 : i32
    %c0_i32_0 = arith.constant 0 : i32
    return %arg0, %c0_i32 : i32, i32
  }
}

</mosaic_0001>

<llo_original>
// kernel: attribute_logits_gumbel_sample.1
$region0: #{attribute_logits_gumbel_sample.1}
  #allocation0 [shape = 'u32[]', space=smem, size = 0x4, offset = 0x4, fixed_abs, tag = 'smem constant byte address 0x4 - core index']
  #allocation1 [shape = 'u32[144,128]{1,0:T(1,128)}', space=vmem, size = 0x12000, scoped, tag = 'internal scratch']
  %s0 = inlined_call_operand.hbm [shape: f32[10,111], index: 0, kind: input, shape index: {}]
  %s1 = inlined_call_operand.hbm [shape: f32[10,111], index: 1, kind: input, shape index: {}]
  %s2 = inlined_call_operand.hbm [shape: f32[111,111], index: 2, kind: input, shape index: {}]
  %s3 = inlined_call_operand.hbm [shape: f32[10,111], index: 3, kind: output, shape index: {}]
  %s4 = sld [smem:[#allocation0]]
  $region34: #{attribute_logits_gumbel_sample.1} parent=0
    _
  %s6 = ssub.s32 1, %s4
  %s7 = scalar_select 0, %s6, %s4
  $region1: #{attribute_logits_gumbel_sample.1} parent=0
    #allocation2 [shape = 'u8[8192]{0}', space=vmem, size = 0x2000, scoped, tag = 'input window, operand 0, single buffered']
    #allocation3 [shape = 's32[1]{0}', space=sflag, size = 0x4, scoped, tag = 'scoped memory for attribute_logits_gumbel_sample.1']
    #allocation4 [shape = 's32[1]{0}', space=sflag, size = 0x4, scoped, tag = 'scoped memory for attribute_logits_gumbel_sample.1']
    #allocation5 [shape = 'u8[8192]{0}', space=vmem, size = 0x2000, scoped, tag = 'input window, operand 1, single buffered']
    #allocation6 [shape = 's32[1]{0}', space=sflag, size = 0x4, scoped, tag = 'scoped memory for attribute_logits_gumbel_sample.1']
    #allocation7 [shape = 'u8[57344]{0}', space=vmem, size = 0xe000, scoped, tag = 'input window, operand 2, single buffered']
    #allocation8 [shape = 'u8[8192]{0}', space=vmem, size = 0x2000, scoped, tag = 'output window, operand 0, single buffered']
    %8 = vsyncpa [#allocation3], 0
    %9 = vsyncpa [#allocation6], 0
    %10 = vsyncpa [#allocation4], 0
    // Predicated region
    $region2: #{attribute_logits_gumbel_sample.1} parent=1 // pred_check
      _
    $region3: #{attribute_logits_gumbel_sample.1} parent=1 // pred_check_branch
      %12 = sbr.rel (0) target = $region5
    $region4: #{attribute_logits_gumbel_sample.1} parent=1 // pred_region
      %s14 = ssub.s32 256, 256
      %15 = vsyncadd [#allocation3], %s14
      %s16 = sshll.u32 [#allocation2], 4
      %s17 = int_to_ptr.vmem [resolvable:$true] %s16
      %22 = dma.hbm_to_vmem [thread:$0]  %s0, 256, %s17, [#allocation3], 128, 128, 8
    $region5: #{attribute_logits_gumbel_sample.1} parent=1 // pred_fallthru
      _
    // Predicated region
    $region6: #{attribute_logits_gumbel_sample.1} parent=1 // pred_check
      _
    $region7: #{attribute_logits_gumbel_sample.1} parent=1 // pred_check_branch
      %24 = sbr.rel (0) target = $region9
    $region8: #{attribute_logits_gumbel_sample.1} parent=1 // pred_region
      %s26 = ssub.s32 256, 256
      %27 = vsyncadd [#allocation6], %s26
      %s28 = sshll.u32 [#allocation5], 4
      %s29 = int_to_ptr.vmem [resolvable:$true] %s28
      %34 = dma.hbm_to_vmem [thread:$0]  %s1, 256, %s29, [#allocation6], 128, 128, 8
    $region9: #{attribute_logits_gumbel_sample.1} parent=1 // pred_fallthru
      _
    // Predicated region
    $region10: #{attribute_logits_gumbel_sample.1} parent=1 // pred_check
      _
    $region11: #{attribute_logits_gumbel_sample.1} parent=1 // pred_check_branch
      %36 = sbr.rel (0) target = $region13
    $region12: #{attribute_logits_gumbel_sample.1} parent=1 // pred_region
      %s38 = ssub.s32 1792, 1792
      %39 = vsyncadd [#allocation6], %s38
      %s40 = sshll.u32 [#allocation7], 4
      %s41 = int_to_ptr.vmem [resolvable:$true] %s40
      %46 = dma.hbm_to_vmem [thread:$0]  %s2, 1792, %s41, [#allocation6], 128, 128, 8
    $region13: #{attribute_logits_gumbel_sample.1} parent=1 // pred_fallthru
      _
    // Predicated region
    $region14: #{attribute_logits_gumbel_sample.1} parent=1 // pred_check
      _
    $region15: #{attribute_logits_gumbel_sample.1} parent=1 // pred_check_branch
      %48 = sbr.rel (0) target = $region17
    $region16: #{attribute_logits_gumbel_sample.1} parent=1 // pred_region
      %49 = dma.done [#allocation3], 256
    $region17: #{attribute_logits_gumbel_sample.1} parent=1 // pred_fallthru
      _
    // Predicated region
    $region18: #{attribute_logits_gumbel_sample.1} parent=1 // pred_check
      _
    $region19: #{attribute_logits_gumbel_sample.1} parent=1 // pred_check_branch
      %51 = sbr.rel (0) target = $region21
    $region20: #{attribute_logits_gumbel_sample.1} parent=1 // pred_region
      %52 = dma.done [#allocation6], 256
    $region21: #{attribute_logits_gumbel_sample.1} parent=1 // pred_fallthru
      _
    // Predicated region
    $region22: #{attribute_logits_gumbel_sample.1} parent=1 // pred_check
      _
    $region23: #{attribute_logits_gumbel_sample.1} parent=1 // pred_check_branch
      %54 = sbr.rel (0) target = $region25
    $region24: #{attribute_logits_gumbel_sample.1} parent=1 // pred_region
      %55 = dma.done [#allocation6], 1792
    $region25: #{attribute_logits_gumbel_sample.1} parent=1 // pred_fallthru
      _
    %v56 = vld [vmem:[#allocation2] sm:$0xff]
    %v57 = vld [vmem:[#allocation2 + $0x8] sm:$0xff]
    %v58 = vld [vmem:[#allocation5] sm:$0xff]
    %v59 = vld [vmem:[#allocation5 + $0x8] sm:$0xff]
    %v60 = vadd.f32 %v58, 1e-20
    %v61 = vadd.f32 %v59, 1e-20
    %v62 = vlog2.pop %v60
    %v63 = vmul.f32 %v62, 0.6931472
    %v64 = vlog2.pop %v61
    %v65 = vmul.f32 %v64, 0.6931472
    %v66 = vsub.f32 0.0, %v63
    %v67 = vsub.f32 0.0, %v65
    %v68 = vadd.f32 %v66, 1e-20
    %v69 = vadd.f32 %v67, 1e-20
    %v70 = vlog2.pop %v68
    %v71 = vmul.f32 %v70, 0.6931472
    %v72 = vlog2.pop %v69
    %v73 = vmul.f32 %v72, 0.6931472
    %v74 = vsub.f32 0.0, %v71
    %v75 = vsub.f32 0.0, %v73
    %v76 = vadd.f32 %v56, %v74
    %v77 = vadd.f32 %v57, %v75
    %v78 = vmul.f32 %v76, 2.0
    %v79 = vmul.f32 %v77, 2.0
    %v80 = vlaneseq
    %v81 = vand.u32 %v80, 127
    %vm82 = vcmp.lt.s32.totalorder %v81, 106
    %v83 = vsel %vm82, 1, 0
    %vm84 = vcmp.eq.s32.totalorder %v83, 1
    %v85 = vsel %vm84, %v78, -1e+30
    %v86 = vsel %vm84, %v79, -1e+30
    %vm87 = vcmask 908288
    %v88 = vsel %vm87, %v85, -inf
    %89 = vmax.xlane.f32.xlu0 %v88
    %v90 = vpop.xlane.xlu0 %89
    %v91 = vsel %vm87, %v86, -inf
    %92 = vmax.xlane.f32.xlu0 %v91
    %v93 = vpop.xlane.xlu0 %92
    %v94 = vsub.f32 %v78, %v90
    %v95 = vsub.f32 %v79, %v93
    %v96 = vsel %vm84, %v94, -1e+30
    %v97 = vsel %vm84, %v95, -1e+30
    %v98 = vmul.f32 %v96, 1.442695
    %v99 = vpow.pop %v98
    %v100 = vmul.f32 %v97, 1.442695
    %v101 = vpow.pop %v100
    %v102 = vld [vmem:[#allocation7] sm:$0xff]
    %v103 = vld [vmem:[#allocation7 + $0x8] sm:$0xff]
    %v104 = vld [vmem:[#allocation7 + $0x10] sm:$0xff]
    %v105 = vld [vmem:[#allocation7 + $0x18] sm:$0xff]
    %v106 = vld [vmem:[#allocation7 + $0x20] sm:$0xff]
    %v107 = vld [vmem:[#allocation7 + $0x28] sm:$0xff]
    %v108 = vld [vmem:[#allocation7 + $0x30] sm:$0xff]
    %v109 = vld [vmem:[#allocation7 + $0x38] sm:$0xff]
    %v110 = vld [vmem:[#allocation7 + $0x40] sm:$0xff]
    %v111 = vld [vmem:[#allocation7 + $0x48] sm:$0xff]
    %v112 = vld [vmem:[#allocation7 + $0x50] sm:$0xff]
    %v113 = vld [vmem:[#allocation7 + $0x58] sm:$0xff]
    %v114 = vld [vmem:[#allocation7 + $0x60] sm:$0xff]
    %v115 = vld [vmem:[#allocation7 + $0x68] sm:$0x7f]
    %v117 = vsel %vm87, %v99, 0
    %v120 = vsel %vm87, %v101, 0
    %vm122 = vcmask 1046528
    %v124 = vsel %vm122, %v115, 0
    %126 = vmatprep.subr.mxu0 0.0
    %127 = vmatpush1.msra.mxu0 0.0
    %128 = vmatprep.subr.mxu0 0.0
    %129 = vmatpush1.msra.mxu0 0.0
    %130 = vmatprep.subr.mxu0 0.0
    %v131 = vand.u32 %v124, 4294901760
    %132 = vmatpush1.msra.mxu0 %v131
    %133 = vmatprep.subr.mxu0 0.0
    %v134 = vand.u32 %v114, 4294901760
    %135 = vmatpush1.msra.mxu0 %v134
    %136 = vmatprep.subr.mxu0 0.0
    %v137 = vand.u32 %v113, 4294901760
    %138 = vmatpush1.msra.mxu0 %v137
    %139 = vmatprep.subr.mxu0 0.0
    %v140 = vand.u32 %v112, 4294901760
    %141 = vmatpush1.msra.mxu0 %v140
    %142 = vmatprep.subr.mxu0 0.0
    %v143 = vand.u32 %v111, 4294901760
    %144 = vmatpush1.msra.mxu0 %v143
    %145 = vmatprep.subr.mxu0 0.0
    %v146 = vand.u32 %v110, 4294901760
    %147 = vmatpush1.msra.mxu0 %v146
    %148 = vmatprep.subr.mxu0 0.0
    %v149 = vand.u32 %v109, 4294901760
    %150 = vmatpush1.msra.mxu0 %v149
    %151 = vmatprep.subr.mxu0 0.0
    %v152 = vand.u32 %v108, 4294901760
    %153 = vmatpush1.msra.mxu0 %v152
    %154 = vmatprep.subr.mxu0 0.0
    %v155 = vand.u32 %v107, 4294901760
    %156 = vmatpush1.msra.mxu0 %v155
    %157 = vmatprep.subr.mxu0 0.0
    %v158 = vand.u32 %v106, 4294901760
    %159 = vmatpush1.msra.mxu0 %v158
    %160 = vmatprep.subr.mxu0 0.0
    %v161 = vand.u32 %v105, 4294901760
    %162 = vmatpush1.msra.mxu0 %v161
    %163 = vmatprep.subr.mxu0 0.0
    %v164 = vand.u32 %v104, 4294901760
    %165 = vmatpush1.msra.mxu0 %v164
    %166 = vmatprep.subr.mxu0 0.0
    %v167 = vand.u32 %v103, 4294901760
    %168 = vmatpush1.msra.mxu0 %v167
    %169 = vmatprep.subr.mxu0 0.0
    %v170 = vand.u32 %v102, 4294901760
    %171 = vmatpush1.msra.mxu0 %v170
    %172 = vmatprep.subr.mxu0 0.0
    %173 = vmatpush2.msra.mxu0 0.0
    %174 = vmatprep.subr.mxu0 0.0
    %175 = vmatpush2.msra.mxu0 0.0
    %176 = vmatprep.subr.mxu0 0.0
    %177 = vmatpush2.msra.mxu0 0.0
    %178 = vmatprep.subr.mxu0 0.0
    %179 = vmatpush2.msra.mxu0 0.0
    %180 = vmatprep.subr.mxu0 0.0
    %181 = vmatpush2.msra.mxu0 0.0
    %182 = vmatprep.subr.mxu0 0.0
    %183 = vmatpush2.msra.mxu0 0.0
    %184 = vmatprep.subr.mxu0 0.0
    %185 = vmatpush2.msra.mxu0 0.0
    %186 = vmatprep.subr.mxu0 0.0
    %187 = vmatpush2.msra.mxu0 0.0
    %188 = vmatprep.subr.mxu0 0.0
    %189 = vmatpush2.msra.mxu0 0.0
    %190 = vmatprep.subr.mxu0 0.0
    %191 = vmatpush2.msra.mxu0 0.0
    %192 = vmatprep.subr.mxu0 0.0
    %193 = vmatpush2.msra.mxu0 0.0
    %194 = vmatprep.subr.mxu0 0.0
    %195 = vmatpush2.msra.mxu0 0.0
    %196 = vmatprep.subr.mxu0 0.0
    %197 = vmatpush2.msra.mxu0 0.0
    %198 = vmatprep.subr.mxu0 0.0
    %199 = vmatpush2.msra.mxu0 0.0
    %200 = vmatprep.subr.mxu0 0.0
    %201 = vmatpush2.msra.mxu0 0.0
    %202 = vmatprep.subr.mxu0 0.0
    %203 = vmatpush2.msra.mxu0 0.0
    %204 = vmatprep.mubr.f32.mxu0 0.0
    %v205 = vand.u32 %v117, 4294901760
    %v206 = vsub.f32 %v117, %v205
    %v207 = vand.u32 %v206, 4294901760
    %v208 = vsub.f32 %v206, %v207
    %v209 = vand.u32 %v208, 4294901760
    %210 = vmatmul.mubr.f32.gmra.mxu0 %v209
    %v211 = vpop.f32.mrf.mxu0
    %v212 = vadd.f32 1e-30, %v211
    %v213 = vpop.f32.mrf.mxu0
    %214 = vmatprep.mubr.f32.mxu0 0.0
    %v215 = vand.u32 %v120, 4294901760
    %v216 = vsub.f32 %v120, %v215
    %v217 = vand.u32 %v216, 4294901760
    %v218 = vsub.f32 %v216, %v217
    %v219 = vand.u32 %v218, 4294901760
    %220 = vmatmul.mubr.f32.gmra.mxu0 %v219
    %v221 = vpop.f32.mrf.mxu0
    %v222 = vadd.f32 1e-30, %v221
    %v223 = vpop.f32.mrf.mxu0
    %224 = vdwg.mxu0
    %225 = vmatprep.subr.mxu0 0.0
    %226 = vmatpush1.msra.mxu0 0.0
    %227 = vmatprep.subr.mxu0 0.0
    %228 = vmatpush1.msra.mxu0 0.0
    %229 = vmatprep.subr.mxu0 0.0
    %v230 = vand.u32 %v124, 4294901760
    %v231 = vsub.f32 %v124, %v230
    %v232 = vand.u32 %v231, 4294901760
    %v233 = vsub.f32 %v231, %v232
    %v234 = vand.u32 %v233, 4294901760
    %235 = vmatpush1.msra.mxu0 %v234
    %236 = vmatprep.subr.mxu0 0.0
    %v237 = vand.u32 %v114, 4294901760
    %v238 = vsub.f32 %v114, %v237
    %v239 = vand.u32 %v238, 4294901760
    %v240 = vsub.f32 %v238, %v239
    %v241 = vand.u32 %v240, 4294901760
    %242 = vmatpush1.msra.mxu0 %v241
    %243 = vmatprep.subr.mxu0 0.0
    %v244 = vand.u32 %v113, 4294901760
    %v245 = vsub.f32 %v113, %v244
    %v246 = vand.u32 %v245, 4294901760
    %v247 = vsub.f32 %v245, %v246
    %v248 = vand.u32 %v247, 4294901760
    %249 = vmatpush1.msra.mxu0 %v248
    %250 = vmatprep.subr.mxu0 0.0
    %v251 = vand.u32 %v112, 4294901760
    %v252 = vsub.f32 %v112, %v251
    %v253 = vand.u32 %v252, 4294901760
    %v254 = vsub.f32 %v252, %v253
    %v255 = vand.u32 %v254, 4294901760
    %256 = vmatpush1.msra.mxu0 %v255
    %257 = vmatprep.subr.mxu0 0.0
    %v258 = vand.u32 %v111, 4294901760
    %v259 = vsub.f32 %v111, %v258
    %v260 = vand.u32 %v259, 4294901760
    %v261 = vsub.f32 %v259, %v260
    %v262 = vand.u32 %v261, 4294901760
    %263 = vmatpush1.msra.mxu0 %v262
    %264 = vmatprep.subr.mxu0 0.0
    %v265 = vand.u32 %v110, 4294901760
    %v266 = vsub.f32 %v110, %v265
    %v267 = vand.u32 %v266, 4294901760
    %v268 = vsub.f32 %v266, %v267
    %v269 = vand.u32 %v268, 4294901760
    %270 = vmatpush1.msra.mxu0 %v269
    %271 = vmatprep.subr.mxu0 0.0
    %v272 = vand.u32 %v109, 4294901760
    %v273 = vsub.f32 %v109, %v272
    %v274 = vand.u32 %v273, 4294901760
    %v275 = vsub.f32 %v273, %v274
    %v276 = vand.u32 %v275, 4294901760
    %277 = vmatpush1.msra.mxu0 %v276
    %278 = vmatprep.subr.mxu0 0.0
    %v279 = vand.u32 %v108, 4294901760
    %v280 = vsub.f32 %v108, %v279
    %v281 = vand.u32 %v280, 4294901760
    %v282 = vsub.f32 %v280, %v281
    %v283 = vand.u32 %v282, 4294901760
    %284 = vmatpush1.msra.mxu0 %v283
    %285 = vmatprep.subr.mxu0 0.0
    %v286 = vand.u32 %v107, 4294901760
    %v287 = vsub.f32 %v107, %v286
    %v288 = vand.u32 %v287, 4294901760
    %v289 = vsub.f32 %v287, %v288
    %v290 = vand.u32 %v289, 4294901760
    %291 = vmatpush1.msra.mxu0 %v290
    %292 = vmatprep.subr.mxu0 0.0
    %v293 = vand.u32 %v106, 4294901760
    %v294 = vsub.f32 %v106, %v293
    %v295 = vand.u32 %v294, 4294901760
    %v296 = vsub.f32 %v294, %v295
    %v297 = vand.u32 %v296, 4294901760
    %298 = vmatpush1.msra.mxu0 %v297
    %299 = vmatprep.subr.mxu0 0.0
    %v300 = vand.u32 %v105, 4294901760
    %v301 = vsub.f32 %v105, %v300
    %v302 = vand.u32 %v301, 4294901760
    %v303 = vsub.f32 %v301, %v302
    %v304 = vand.u32 %v303, 4294901760
    %305 = vmatpush1.msra.mxu0 %v304
    %306 = vmatprep.subr.mxu0 0.0
    %v307 = vand.u32 %v104, 4294901760
    %v308 = vsub.f32 %v104, %v307
    %v309 = vand.u32 %v308, 4294901760
    %v310 = vsub.f32 %v308, %v309
    %v311 = vand.u32 %v310, 4294901760
    %312 = vmatpush1.msra.mxu0 %v311
    %313 = vmatprep.subr.mxu0 0.0
    %v314 = vand.u32 %v103, 4294901760
    %v315 = vsub.f32 %v103, %v314
    %v316 = vand.u32 %v315, 4294901760
    %v317 = vsub.f32 %v315, %v316
    %v318 = vand.u32 %v317, 4294901760
    %319 = vmatpush1.msra.mxu0 %v318
    %320 = vmatprep.subr.mxu0 0.0
    %v321 = vand.u32 %v102, 4294901760
    %v322 = vsub.f32 %v102, %v321
    %v323 = vand.u32 %v322, 4294901760
    %v324 = vsub.f32 %v322, %v323
    %v325 = vand.u32 %v324, 4294901760
    %326 = vmatpush1.msra.mxu0 %v325
    %327 = vmatprep.subr.mxu0 0.0
    %328 = vmatpush2.msra.mxu0 0.0
    %329 = vmatprep.subr.mxu0 0.0
    %330 = vmatpush2.msra.mxu0 0.0
    %331 = vmatprep.subr.mxu0 0.0
    %332 = vmatpush2.msra.mxu0 0.0
    %333 = vmatprep.subr.mxu0 0.0
    %334 = vmatpush2.msra.mxu0 0.0
    %335 = vmatprep.subr.mxu0 0.0
    %336 = vmatpush2.msra.mxu0 0.0
    %337 = vmatprep.subr.mxu0 0.0
    %338 = vmatpush2.msra.mxu0 0.0
    %339 = vmatprep.subr.mxu0 0.0
    %340 = vmatpush2.msra.mxu0 0.0
    %341 = vmatprep.subr.mxu0 0.0
    %342 = vmatpush2.msra.mxu0 0.0
    %343 = vmatprep.subr.mxu0 0.0
    %344 = vmatpush2.msra.mxu0 0.0
    %345 = vmatprep.subr.mxu0 0.0
    %346 = vmatpush2.msra.mxu0 0.0
    %347 = vmatprep.subr.mxu0 0.0
    %348 = vmatpush2.msra.mxu0 0.0
    %349 = vmatprep.subr.mxu0 0.0
    %350 = vmatpush2.msra.mxu0 0.0
    %351 = vmatprep.subr.mxu0 0.0
    %352 = vmatpush2.msra.mxu0 0.0
    %353 = vmatprep.subr.mxu0 0.0
    %354 = vmatpush2.msra.mxu0 0.0
    %355 = vmatprep.subr.mxu0 0.0
    %356 = vmatpush2.msra.mxu0 0.0
    %357 = vmatprep.subr.mxu0 0.0
    %358 = vmatpush2.msra.mxu0 0.0
    %359 = vmatprep.mubr.f32.mxu0 0.0
    %v360 = vand.u32 %v117, 4294901760
    %361 = vmatmul.mubr.f32.gmra.mxu0 %v360
    %v362 = vpop.f32.mrf.mxu0
    %v363 = vadd.f32 %v212, %v362
    %v364 = vpop.f32.mrf.mxu0
    %365 = vmatprep.mubr.f32.mxu0 0.0
    %v366 = vand.u32 %v120, 4294901760
    %367 = vmatmul.mubr.f32.gmra.mxu0 %v366
    %v368 = vpop.f32.mrf.mxu0
    %v369 = vadd.f32 %v222, %v368
    %v370 = vpop.f32.mrf.mxu0
    %371 = vdwg.mxu0
    %372 = vmatprep.subr.mxu0 0.0
    %373 = vmatpush1.msra.mxu0 0.0
    %374 = vmatprep.subr.mxu0 0.0
    %375 = vmatpush1.msra.mxu0 0.0
    %376 = vmatprep.subr.mxu0 0.0
    %v377 = vand.u32 %v124, 4294901760
    %v378 = vsub.f32 %v124, %v377
    %379 = vmatpush1.msra.mxu0 %v378
    %380 = vmatprep.subr.mxu0 0.0
    %v381 = vand.u32 %v114, 4294901760
    %v382 = vsub.f32 %v114, %v381
    %383 = vmatpush1.msra.mxu0 %v382
    %384 = vmatprep.subr.mxu0 0.0
    %v385 = vand.u32 %v113, 4294901760
    %v386 = vsub.f32 %v113, %v385
    %387 = vmatpush1.msra.mxu0 %v386
    %388 = vmatprep.subr.mxu0 0.0
    %v389 = vand.u32 %v112, 4294901760
    %v390 = vsub.f32 %v112, %v389
    %391 = vmatpush1.msra.mxu0 %v390
    %392 = vmatprep.subr.mxu0 0.0
    %v393 = vand.u32 %v111, 4294901760
    %v394 = vsub.f32 %v111, %v393
    %395 = vmatpush1.msra.mxu0 %v394
    %396 = vmatprep.subr.mxu0 0.0
    %v397 = vand.u32 %v110, 4294901760
    %v398 = vsub.f32 %v110, %v397
    %399 = vmatpush1.msra.mxu0 %v398
    %400 = vmatprep.subr.mxu0 0.0
    %v401 = vand.u32 %v109, 4294901760
    %v402 = vsub.f32 %v109, %v401
    %403 = vmatpush1.msra.mxu0 %v402
    %404 = vmatprep.subr.mxu0 0.0
    %v405 = vand.u32 %v108, 4294901760
    %v406 = vsub.f32 %v108, %v405
    %407 = vmatpush1.msra.mxu0 %v406
    %408 = vmatprep.subr.mxu0 0.0
    %v409 = vand.u32 %v107, 4294901760
    %v410 = vsub.f32 %v107, %v409
    %411 = vmatpush1.msra.mxu0 %v410
    %412 = vmatprep.subr.mxu0 0.0
    %v413 = vand.u32 %v106, 4294901760
    %v414 = vsub.f32 %v106, %v413
    %415 = vmatpush1.msra.mxu0 %v414
    %416 = vmatprep.subr.mxu0 0.0
    %v417 = vand.u32 %v105, 4294901760
    %v418 = vsub.f32 %v105, %v417
    %419 = vmatpush1.msra.mxu0 %v418
    %420 = vmatprep.subr.mxu0 0.0
    %v421 = vand.u32 %v104, 4294901760
    %v422 = vsub.f32 %v104, %v421
    %423 = vmatpush1.msra.mxu0 %v422
    %424 = vmatprep.subr.mxu0 0.0
    %v425 = vand.u32 %v103, 4294901760
    %v426 = vsub.f32 %v103, %v425
    %427 = vmatpush1.msra.mxu0 %v426
    %428 = vmatprep.subr.mxu0 0.0
    %v429 = vand.u32 %v102, 4294901760
    %v430 = vsub.f32 %v102, %v429
    %431 = vmatpush1.msra.mxu0 %v430
    %432 = vmatprep.subr.mxu0 0.0
    %433 = vmatpush2.msra.mxu0 0.0
    %434 = vmatprep.subr.mxu0 0.0
    %435 = vmatpush2.msra.mxu0 0.0
    %436 = vmatprep.subr.mxu0 0.0
    %437 = vmatpush2.msra.mxu0 0.0
    %438 = vmatprep.subr.mxu0 0.0
    %439 = vmatpush2.msra.mxu0 0.0
    %440 = vmatprep.subr.mxu0 0.0
    %441 = vmatpush2.msra.mxu0 0.0
    %442 = vmatprep.subr.mxu0 0.0
    %443 = vmatpush2.msra.mxu0 0.0
    %444 = vmatprep.subr.mxu0 0.0
    %445 = vmatpush2.msra.mxu0 0.0
    %446 = vmatprep.subr.mxu0 0.0
    %447 = vmatpush2.msra.mxu0 0.0
    %448 = vmatprep.subr.mxu0 0.0
    %449 = vmatpush2.msra.mxu0 0.0
    %450 = vmatprep.subr.mxu0 0.0
    %451 = vmatpush2.msra.mxu0 0.0
    %452 = vmatprep.subr.mxu0 0.0
    %453 = vmatpush2.msra.mxu0 0.0
    %454 = vmatprep.subr.mxu0 0.0
    %455 = vmatpush2.msra.mxu0 0.0
    %456 = vmatprep.subr.mxu0 0.0
    %457 = vmatpush2.msra.mxu0 0.0
    %458 = vmatprep.subr.mxu0 0.0
    %459 = vmatpush2.msra.mxu0 0.0
    %460 = vmatprep.subr.mxu0 0.0
    %461 = vmatpush2.msra.mxu0 0.0
    %462 = vmatprep.subr.mxu0 0.0
    %463 = vmatpush2.msra.mxu0 0.0
    %464 = vmatprep.mubr.f32.mxu0 0.0
    %v465 = vand.u32 %v117, 4294901760
    %v466 = vsub.f32 %v117, %v465
    %467 = vmatmul.mubr.f32.gmra.mxu0 %v466
    %v468 = vpop.f32.mrf.mxu0
    %v469 = vadd.f32 %v363, %v468
    %v470 = vpop.f32.mrf.mxu0
    %471 = vmatprep.mubr.f32.mxu0 0.0
    %v472 = vand.u32 %v120, 4294901760
    %v473 = vsub.f32 %v120, %v472
    %474 = vmatmul.mubr.f32.gmra.mxu0 %v473
    %v475 = vpop.f32.mrf.mxu0
    %v476 = vadd.f32 %v369, %v475
    %v477 = vpop.f32.mrf.mxu0
    %478 = vdwg.mxu0
    %479 = vmatprep.subr.mxu0 0.0
    %480 = vmatpush1.msra.mxu0 0.0
    %481 = vmatprep.subr.mxu0 0.0
    %482 = vmatpush1.msra.mxu0 0.0
    %483 = vmatprep.subr.mxu0 0.0
    %v484 = vand.u32 %v124, 4294901760
    %485 = vmatpush1.msra.mxu0 %v484
    %486 = vmatprep.subr.mxu0 0.0
    %v487 = vand.u32 %v114, 4294901760
    %488 = vmatpush1.msra.mxu0 %v487
    %489 = vmatprep.subr.mxu0 0.0
    %v490 = vand.u32 %v113, 4294901760
    %491 = vmatpush1.msra.mxu0 %v490
    %492 = vmatprep.subr.mxu0 0.0
    %v493 = vand.u32 %v112, 4294901760
    %494 = vmatpush1.msra.mxu0 %v493
    %495 = vmatprep.subr.mxu0 0.0
    %v496 = vand.u32 %v111, 4294901760
    %497 = vmatpush1.msra.mxu0 %v496
    %498 = vmatprep.subr.mxu0 0.0
    %v499 = vand.u32 %v110, 4294901760
    %500 = vmatpush1.msra.mxu0 %v499
    %501 = vmatprep.subr.mxu0 0.0
    %v502 = vand.u32 %v109, 4294901760
    %503 = vmatpush1.msra.mxu0 %v502
    %504 = vmatprep.subr.mxu0 0.0
    %v505 = vand.u32 %v108, 4294901760
    %506 = vmatpush1.msra.mxu0 %v505
    %507 = vmatprep.subr.mxu0 0.0
    %v508 = vand.u32 %v107, 4294901760
    %509 = vmatpush1.msra.mxu0 %v508
    %510 = vmatprep.subr.mxu0 0.0
    %v511 = vand.u32 %v106, 4294901760
    %512 = vmatpush1.msra.mxu0 %v511
    %513 = vmatprep.subr.mxu0 0.0
    %v514 = vand.u32 %v105, 4294901760
    %515 = vmatpush1.msra.mxu0 %v514
    %516 = vmatprep.subr.mxu0 0.0
    %v517 = vand.u32 %v104, 4294901760
    %518 = vmatpush1.msra.mxu0 %v517
    %519 = vmatprep.subr.mxu0 0.0
    %v520 = vand.u32 %v103, 4294901760
    %521 = vmatpush1.msra.mxu0 %v520
    %522 = vmatprep.subr.mxu0 0.0
    %v523 = vand.u32 %v102, 4294901760
    %524 = vmatpush1.msra.mxu0 %v523
    %525 = vmatprep.subr.mxu0 0.0
    %526 = vmatpush2.msra.mxu0 0.0
    %527 = vmatprep.subr.mxu0 0.0
    %528 = vmatpush2.msra.mxu0 0.0
    %529 = vmatprep.subr.mxu0 0.0
    %530 = vmatpush2.msra.mxu0 0.0
    %531 = vmatprep.subr.mxu0 0.0
    %532 = vmatpush2.msra.mxu0 0.0
    %533 = vmatprep.subr.mxu0 0.0
    %534 = vmatpush2.msra.mxu0 0.0
    %535 = vmatprep.subr.mxu0 0.0
    %536 = vmatpush2.msra.mxu0 0.0
    %537 = vmatprep.subr.mxu0 0.0
    %538 = vmatpush2.msra.mxu0 0.0
    %539 = vmatprep.subr.mxu0 0.0
    %540 = vmatpush2.msra.mxu0 0.0
    %541 = vmatprep.subr.mxu0 0.0
    %542 = vmatpush2.msra.mxu0 0.0
    %543 = vmatprep.subr.mxu0 0.0
    %544 = vmatpush2.msra.mxu0 0.0
    %545 = vmatprep.subr.mxu0 0.0
    %546 = vmatpush2.msra.mxu0 0.0
    %547 = vmatprep.subr.mxu0 0.0
    %548 = vmatpush2.msra.mxu0 0.0
    %549 = vmatprep.subr.mxu0 0.0
    %550 = vmatpush2.msra.mxu0 0.0
    %551 = vmatprep.subr.mxu0 0.0
    %552 = vmatpush2.msra.mxu0 0.0
    %553 = vmatprep.subr.mxu0 0.0
    %554 = vmatpush2.msra.mxu0 0.0
    %555 = vmatprep.subr.mxu0 0.0
    %556 = vmatpush2.msra.mxu0 0.0
    %557 = vmatprep.mubr.f32.mxu0 0.0
    %v558 = vand.u32 %v117, 4294901760
    %v559 = vsub.f32 %v117, %v558
    %v560 = vand.u32 %v559, 4294901760
    %561 = vmatmul.mubr.f32.gmra.mxu0 %v560
    %v562 = vpop.f32.mrf.mxu0
    %v563 = vadd.f32 %v469, %v562
    %v564 = vpop.f32.mrf.mxu0
    %565 = vmatprep.mubr.f32.mxu0 0.0
    %v566 = vand.u32 %v120, 4294901760
    %v567 = vsub.f32 %v120, %v566
    %v568 = vand.u32 %v567, 4294901760
    %569 = vmatmul.mubr.f32.gmra.mxu0 %v568
    %v570 = vpop.f32.mrf.mxu0
    %v571 = vadd.f32 %v476, %v570
    %v572 = vpop.f32.mrf.mxu0
    %573 = vdwg.mxu0
    %574 = vmatprep.subr.mxu0 0.0
    %575 = vmatpush1.msra.mxu0 0.0
    %576 = vmatprep.subr.mxu0 0.0
    %577 = vmatpush1.msra.mxu0 0.0
    %578 = vmatprep.subr.mxu0 0.0
    %v579 = vand.u32 %v124, 4294901760
    %v580 = vsub.f32 %v124, %v579
    %v581 = vand.u32 %v580, 4294901760
    %582 = vmatpush1.msra.mxu0 %v581
    %583 = vmatprep.subr.mxu0 0.0
    %v584 = vand.u32 %v114, 4294901760
    %v585 = vsub.f32 %v114, %v584
    %v586 = vand.u32 %v585, 4294901760
    %587 = vmatpush1.msra.mxu0 %v586
    %588 = vmatprep.subr.mxu0 0.0
    %v589 = vand.u32 %v113, 4294901760
    %v590 = vsub.f32 %v113, %v589
    %v591 = vand.u32 %v590, 4294901760
    %592 = vmatpush1.msra.mxu0 %v591
    %593 = vmatprep.subr.mxu0 0.0
    %v594 = vand.u32 %v112, 4294901760
    %v595 = vsub.f32 %v112, %v594
    %v596 = vand.u32 %v595, 4294901760
    %597 = vmatpush1.msra.mxu0 %v596
    %598 = vmatprep.subr.mxu0 0.0
    %v599 = vand.u32 %v111, 4294901760
    %v600 = vsub.f32 %v111, %v599
    %v601 = vand.u32 %v600, 4294901760
    %602 = vmatpush1.msra.mxu0 %v601
    %603 = vmatprep.subr.mxu0 0.0
    %v604 = vand.u32 %v110, 4294901760
    %v605 = vsub.f32 %v110, %v604
    %v606 = vand.u32 %v605, 4294901760
    %607 = vmatpush1.msra.mxu0 %v606
    %608 = vmatprep.subr.mxu0 0.0
    %v609 = vand.u32 %v109, 4294901760
    %v610 = vsub.f32 %v109, %v609
    %v611 = vand.u32 %v610, 4294901760
    %612 = vmatpush1.msra.mxu0 %v611
    %613 = vmatprep.subr.mxu0 0.0
    %v614 = vand.u32 %v108, 4294901760
    %v615 = vsub.f32 %v108, %v614
    %v616 = vand.u32 %v615, 4294901760
    %617 = vmatpush1.msra.mxu0 %v616
    %618 = vmatprep.subr.mxu0 0.0
    %v619 = vand.u32 %v107, 4294901760
    %v620 = vsub.f32 %v107, %v619
    %v621 = vand.u32 %v620, 4294901760
    %622 = vmatpush1.msra.mxu0 %v621
    %623 = vmatprep.subr.mxu0 0.0
    %v624 = vand.u32 %v106, 4294901760
    %v625 = vsub.f32 %v106, %v624
    %v626 = vand.u32 %v625, 4294901760
    %627 = vmatpush1.msra.mxu0 %v626
    %628 = vmatprep.subr.mxu0 0.0
    %v629 = vand.u32 %v105, 4294901760
    %v630 = vsub.f32 %v105, %v629
    %v631 = vand.u32 %v630, 4294901760
    %632 = vmatpush1.msra.mxu0 %v631
    %633 = vmatprep.subr.mxu0 0.0
    %v634 = vand.u32 %v104, 4294901760
    %v635 = vsub.f32 %v104, %v634
    %v636 = vand.u32 %v635, 4294901760
    %637 = vmatpush1.msra.mxu0 %v636
    %638 = vmatprep.subr.mxu0 0.0
    %v639 = vand.u32 %v103, 4294901760
    %v640 = vsub.f32 %v103, %v639
    %v641 = vand.u32 %v640, 4294901760
    %642 = vmatpush1.msra.mxu0 %v641
    %643 = vmatprep.subr.mxu0 0.0
    %v644 = vand.u32 %v102, 4294901760
    %v645 = vsub.f32 %v102, %v644
    %v646 = vand.u32 %v645, 4294901760
    %647 = vmatpush1.msra.mxu0 %v646
    %648 = vmatprep.subr.mxu0 0.0
    %649 = vmatpush2.msra.mxu0 0.0
    %650 = vmatprep.subr.mxu0 0.0
    %651 = vmatpush2.msra.mxu0 0.0
    %652 = vmatprep.subr.mxu0 0.0
    %653 = vmatpush2.msra.mxu0 0.0
    %654 = vmatprep.subr.mxu0 0.0
    %655 = vmatpush2.msra.mxu0 0.0
    %656 = vmatprep.subr.mxu0 0.0
    %657 = vmatpush2.msra.mxu0 0.0
    %658 = vmatprep.subr.mxu0 0.0
    %659 = vmatpush2.msra.mxu0 0.0
    %660 = vmatprep.subr.mxu0 0.0
    %661 = vmatpush2.msra.mxu0 0.0
    %662 = vmatprep.subr.mxu0 0.0
    %663 = vmatpush2.msra.mxu0 0.0
    %664 = vmatprep.subr.mxu0 0.0
    %665 = vmatpush2.msra.mxu0 0.0
    %666 = vmatprep.subr.mxu0 0.0
    %667 = vmatpush2.msra.mxu0 0.0
    %668 = vmatprep.subr.mxu0 0.0
    %669 = vmatpush2.msra.mxu0 0.0
    %670 = vmatprep.subr.mxu0 0.0
    %671 = vmatpush2.msra.mxu0 0.0
    %672 = vmatprep.subr.mxu0 0.0
    %673 = vmatpush2.msra.mxu0 0.0
    %674 = vmatprep.subr.mxu0 0.0
    %675 = vmatpush2.msra.mxu0 0.0
    %676 = vmatprep.subr.mxu0 0.0
    %677 = vmatpush2.msra.mxu0 0.0
    %678 = vmatprep.subr.mxu0 0.0
    %679 = vmatpush2.msra.mxu0 0.0
    %680 = vmatprep.mubr.f32.mxu0 0.0
    %v681 = vand.u32 %v117, 4294901760
    %682 = vmatmul.mubr.f32.gmra.mxu0 %v681
    %v683 = vpop.f32.mrf.mxu0
    %v684 = vadd.f32 %v563, %v683
    %v685 = vpop.f32.mrf.mxu0
    %686 = vmatprep.mubr.f32.mxu0 0.0
    %v687 = vand.u32 %v120, 4294901760
    %688 = vmatmul.mubr.f32.gmra.mxu0 %v687
    %v689 = vpop.f32.mrf.mxu0
    %v690 = vadd.f32 %v571, %v689
    %v691 = vpop.f32.mrf.mxu0
    %692 = vdwg.mxu0
    %693 = vmatprep.subr.mxu0 0.0
    %694 = vmatpush1.msra.mxu0 0.0
    %695 = vmatprep.subr.mxu0 0.0
    %696 = vmatpush1.msra.mxu0 0.0
    %697 = vmatprep.subr.mxu0 0.0
    %v698 = vand.u32 %v124, 4294901760
    %699 = vmatpush1.msra.mxu0 %v698
    %700 = vmatprep.subr.mxu0 0.0
    %v701 = vand.u32 %v114, 4294901760
    %702 = vmatpush1.msra.mxu0 %v701
    %703 = vmatprep.subr.mxu0 0.0
    %v704 = vand.u32 %v113, 4294901760
    %705 = vmatpush1.msra.mxu0 %v704
    %706 = vmatprep.subr.mxu0 0.0
    %v707 = vand.u32 %v112, 4294901760
    %708 = vmatpush1.msra.mxu0 %v707
    %709 = vmatprep.subr.mxu0 0.0
    %v710 = vand.u32 %v111, 4294901760
    %711 = vmatpush1.msra.mxu0 %v710
    %712 = vmatprep.subr.mxu0 0.0
    %v713 = vand.u32 %v110, 4294901760
    %714 = vmatpush1.msra.mxu0 %v713
    %715 = vmatprep.subr.mxu0 0.0
    %v716 = vand.u32 %v109, 4294901760
    %717 = vmatpush1.msra.mxu0 %v716
    %718 = vmatprep.subr.mxu0 0.0
    %v719 = vand.u32 %v108, 4294901760
    %720 = vmatpush1.msra.mxu0 %v719
    %721 = vmatprep.subr.mxu0 0.0
    %v722 = vand.u32 %v107, 4294901760
    %723 = vmatpush1.msra.mxu0 %v722
    %724 = vmatprep.subr.mxu0 0.0
    %v725 = vand.u32 %v106, 4294901760
    %726 = vmatpush1.msra.mxu0 %v725
    %727 = vmatprep.subr.mxu0 0.0
    %v728 = vand.u32 %v105, 4294901760
    %729 = vmatpush1.msra.mxu0 %v728
    %730 = vmatprep.subr.mxu0 0.0
    %v731 = vand.u32 %v104, 4294901760
    %732 = vmatpush1.msra.mxu0 %v731
    %733 = vmatprep.subr.mxu0 0.0
    %v734 = vand.u32 %v103, 4294901760
    %735 = vmatpush1.msra.mxu0 %v734
    %736 = vmatprep.subr.mxu0 0.0
    %v737 = vand.u32 %v102, 4294901760
    %738 = vmatpush1.msra.mxu0 %v737
    %739 = vmatprep.subr.mxu0 0.0
    %740 = vmatpush2.msra.mxu0 0.0
    %741 = vmatprep.subr.mxu0 0.0
    %742 = vmatpush2.msra.mxu0 0.0
    %743 = vmatprep.subr.mxu0 0.0
    %744 = vmatpush2.msra.mxu0 0.0
    %745 = vmatprep.subr.mxu0 0.0
    %746 = vmatpush2.msra.mxu0 0.0
    %747 = vmatprep.subr.mxu0 0.0
    %748 = vmatpush2.msra.mxu0 0.0
    %749 = vmatprep.subr.mxu0 0.0
    %750 = vmatpush2.msra.mxu0 0.0
    %751 = vmatprep.subr.mxu0 0.0
    %752 = vmatpush2.msra.mxu0 0.0
    %753 = vmatprep.subr.mxu0 0.0
    %754 = vmatpush2.msra.mxu0 0.0
    %755 = vmatprep.subr.mxu0 0.0
    %756 = vmatpush2.msra.mxu0 0.0
    %757 = vmatprep.subr.mxu0 0.0
    %758 = vmatpush2.msra.mxu0 0.0
    %759 = vmatprep.subr.mxu0 0.0
    %760 = vmatpush2.msra.mxu0 0.0
    %761 = vmatprep.subr.mxu0 0.0
    %762 = vmatpush2.msra.mxu0 0.0
    %763 = vmatprep.subr.mxu0 0.0
    %764 = vmatpush2.msra.mxu0 0.0
    %765 = vmatprep.subr.mxu0 0.0
    %766 = vmatpush2.msra.mxu0 0.0
    %767 = vmatprep.subr.mxu0 0.0
    %768 = vmatpush2.msra.mxu0 0.0
    %769 = vmatprep.subr.mxu0 0.0
    %770 = vmatpush2.msra.mxu0 0.0
    %771 = vmatprep.mubr.f32.mxu0 0.0
    %v772 = vand.u32 %v117, 4294901760
    %773 = vmatmul.mubr.f32.gmra.mxu0 %v772
    %v774 = vpop.f32.mrf.mxu0
    %v775 = vadd.f32 %v684, %v774
    %v776 = vpop.f32.mrf.mxu0
    %777 = vmatprep.mubr.f32.mxu0 0.0
    %v778 = vand.u32 %v120, 4294901760
    %779 = vmatmul.mubr.f32.gmra.mxu0 %v778
    %v780 = vpop.f32.mrf.mxu0
    %v781 = vadd.f32 %v690, %v780
    %v782 = vpop.f32.mrf.mxu0
    %783 = vdwg.mxu0
    %v784 = vrcp.pop %v775
    %v785 = vmul.f32 %v99, %v784
    %v786 = vrcp.pop %v781
    %v787 = vmul.f32 %v101, %v786
    %v788 = vsel %vm84, %v785, %v56
    %v789 = vsel %vm84, %v787, %v57
    %790 = vst.msk [vmem:[#allocation8] sm:$0xff] %vm87, %v788
    %791 = vst.msk [vmem:[#allocation8 + $0x8] sm:$0xff] %vm87, %v789
    // Predicated region
    $region26: #{attribute_logits_gumbel_sample.1} parent=1 // pred_check
      _
    $region27: #{attribute_logits_gumbel_sample.1} parent=1 // pred_check_branch
      %793 = sbr.rel (0) target = $region29
    $region28: #{attribute_logits_gumbel_sample.1} parent=1 // pred_region
      %s795 = ssub.s32 256, 256
      %796 = vsyncadd [#allocation4], %s795
      %s797 = sshll.u32 [#allocation8], 4
      %s798 = int_to_ptr.vmem [resolvable:$true] %s797
      %803 = dma.vmem_to_hbm [thread:$0]  %s798, 256, %s3, [#allocation4], 128, 128, 8
    $region29: #{attribute_logits_gumbel_sample.1} parent=1 // pred_fallthru
      _
    // Predicated region
    $region30: #{attribute_logits_gumbel_sample.1} parent=1 // pred_check
      _
    $region31: #{attribute_logits_gumbel_sample.1} parent=1 // pred_check_branch
      %805 = sbr.rel (0) target = $region33
    $region32: #{attribute_logits_gumbel_sample.1} parent=1 // pred_region
      %806 = dma.done [#allocation4], 256
    $region33: #{attribute_logits_gumbel_sample.1} parent=1 // pred_fallthru
      _
    %807 = vsyncpa [#allocation3], 1
    %808 = vsyncpa [#allocation6], 1
    %809 = vsyncpa [#allocation4], 1

</llo_original>
